<compile_context>
chip_gen: v7x
topology: tpu7x:2x2x1
jax: 0.10.0
libtpu: 0.0.40
codegen_flags: <defaults>
</compile_context>

<pallas_src>
import functools

import jax
import jax.numpy as jnp
from jax.experimental import pallas as pl
from jax.experimental.pallas import tpu as pltpu


DEFAULT_BATCH_TILE = 4096  # rows per grid step (multiple of 8); per-tile VMEM is
                           # ~3-4 MiB, well under the scoped default on v5e/v6e/v7x.


# ----------------------------- Pallas kernels ------------------------------ #

def _actor_kernel(obs_ref, w1_ref, b1_ref, w2_ref, b2_ref, w3_ref, b3_ref, out_ref):
    # Linear(obs_dim, H) + ReLU  (bf16 operands, f32 accumulation)
    obs = obs_ref[...].astype(jnp.bfloat16)
    h = jnp.dot(obs, w1_ref[...], preferred_element_type=jnp.float32) + b1_ref[...]
    h = jnp.maximum(h, 0.0)
    # RegressionHead.main: Linear(H, H) + ReLU   (layer_num = 1)
    h = jnp.dot(h.astype(jnp.bfloat16), w2_ref[...],
                preferred_element_type=jnp.float32) + b2_ref[...]
    h = jnp.maximum(h, 0.0)
    # RegressionHead.last: Linear(H, A) + tanh   (final_tanh = True)
    y = jnp.dot(h.astype(jnp.bfloat16), w3_ref[...],
                preferred_element_type=jnp.float32) + b3_ref[...]
    out_ref[...] = jnp.tanh(y).astype(out_ref.dtype)


def _critic_kernel(obs_ref, act_ref, w1_ref, b1_ref, w2_ref, b2_ref,
                   w3_ref, b3_ref, out_ref):
    # torch.cat([obs, action], dim=1) @ W1 as ONE K=(obs_dim+A) matmul; the lane
    # concat lands on the XLU slot which has plenty of slack.
    x = jnp.concatenate([obs_ref[...], act_ref[...]], axis=-1).astype(jnp.bfloat16)
    h = jnp.dot(x, w1_ref[...], preferred_element_type=jnp.float32) + b1_ref[...]
    h = jnp.maximum(h, 0.0)
    h = jnp.dot(h.astype(jnp.bfloat16), w2_ref[...],
                preferred_element_type=jnp.float32) + b2_ref[...]
    h = jnp.maximum(h, 0.0)
    out_ref[...] = (jnp.dot(h.astype(jnp.bfloat16), w3_ref[...],
                            preferred_element_type=jnp.float32)
                    + b3_ref[...]).astype(out_ref.dtype)


def _fused_kernel(obs_ref,
                  w1p_ref, ab1_ref, aw2_ref, ab2_ref, aw3_ref, ab3_ref,
                  cw1a_ref, cb1_ref, cw2_ref, cb2_ref, cw3_ref, cb3_ref,
                  act_out_ref, q_out_ref):
    H = ab1_ref.shape[-1]
    obs = obs_ref[...].astype(jnp.bfloat16)
    # Shared first layer: obs @ [actor_W1 | critic_W1_obs] -> lane-dense (bt, 2H)
    h12 = jnp.dot(obs, w1p_ref[...], preferred_element_type=jnp.float32)
    # ---- actor branch ----
    h = jnp.maximum(h12[:, :H] + ab1_ref[...], 0.0)
    h = jnp.maximum(jnp.dot(h.astype(jnp.bfloat16), aw2_ref[...],
                            preferred_element_type=jnp.float32) + ab2_ref[...], 0.0)
    action = jnp.tanh(jnp.dot(h.astype(jnp.bfloat16), aw3_ref[...],
                              preferred_element_type=jnp.float32) + ab3_ref[...])
    act_out_ref[...] = action.astype(act_out_ref.dtype)
    # ---- critic branch on (obs, action); action never leaves VMEM ----
    g = (h12[:, H:]
         + jnp.dot(action.astype(jnp.bfloat16), cw1a_ref[...],
                   preferred_element_type=jnp.float32)
         + cb1_ref[...])
    g = jnp.maximum(g, 0.0)
    g = jnp.maximum(jnp.dot(g.astype(jnp.bfloat16), cw2_ref[...],
                            preferred_element_type=jnp.float32) + cb2_ref[...], 0.0)
    q_out_ref[...] = (jnp.dot(g.astype(jnp.bfloat16), cw3_ref[...],
                              preferred_element_type=jnp.float32)
                      + cb3_ref[...]).astype(q_out_ref.dtype)


# ----------------------------- spec / tiling helpers ------------------------ #

def _round_up(x, m):
    return (x + m - 1) // m * m


def _pick_bt(batch, batch_tile):
    # Small RL batches: one tile. Larger batches: at least 2 grid steps so the
    # "parallel" batch axis can shard across both TensorCores on v7x.
    if batch <= 256:
        return _round_up(batch, 8)
    return min(batch_tile, _round_up((batch + 1) // 2, 8))


def _stream_spec(bt, feat):
    # streamed (batch-tiled) array: one (bt, feat) block per grid step
    return pl.BlockSpec((bt, feat), lambda i: (i, 0))


def _resident_spec(arr):
    # whole array stays resident in VMEM across every grid step
    return pl.BlockSpec(arr.shape, lambda i: (0, 0))


def _weight_bytes(weights):
    return int(sum(int(w.size) * w.dtype.itemsize for w in weights))


_COMPILER_PARAMS = pltpu.CompilerParams(dimension_semantics=("parallel",))


# ------------------------------- jitted impls ------------------------------- #

@functools.partial(jax.jit, static_argnames=("batch_tile",))
def _actor_impl(obs, params, batch_tile):
    B, obs_dim = obs.shape
    H = params["a_w1"].shape[1]
    A = params["a_w3"].shape[1]
    bt = _pick_bt(B, batch_tile)
    grid = (pl.cdiv(B, bt),)

    weights = (params["a_w1"].astype(jnp.bfloat16), params["a_b1"],
               params["a_w2"].astype(jnp.bfloat16), params["a_b2"],
               params["a_w3"].astype(jnp.bfloat16), params["a_b3"])
    cost = pl.CostEstimate(
        flops=2 * B * (obs_dim * H + H * H + H * A),
        transcendentals=B * A,
        bytes_accessed=4 * B * (obs_dim + A) + _weight_bytes(weights),
    )

    return pl.pallas_call(
        _actor_kernel,
        out_shape=jax.ShapeDtypeStruct((B, A), jnp.float32),
        grid=grid,
        in_specs=[_stream_spec(bt, obs_dim)] + [_resident_spec(w) for w in weights],
        out_specs=_stream_spec(bt, A),
        compiler_params=_COMPILER_PARAMS,
        cost_estimate=cost,
    )(obs, *weights)


@functools.partial(jax.jit, static_argnames=("batch_tile",))
def _critic_impl(obs, action, params, batch_tile):
    B, obs_dim = obs.shape
    A = action.shape[1]
    H = params["c_w2"].shape[0]
    bt = _pick_bt(B, batch_tile)
    grid = (pl.cdiv(B, bt),)

    weights = (params["c_w1"].astype(jnp.bfloat16), params["c_b1"],
               params["c_w2"].astype(jnp.bfloat16), params["c_b2"],
               params["c_w3"].astype(jnp.bfloat16), params["c_b3"])
    cost = pl.CostEstimate(
        flops=2 * B * ((obs_dim + A) * H + H * H + H),
        transcendentals=0,
        bytes_accessed=4 * B * (obs_dim + A + 1) + _weight_bytes(weights),
    )

    q = pl.pallas_call(
        _critic_kernel,
        out_shape=jax.ShapeDtypeStruct((B, 1), jnp.float32),
        grid=grid,
        in_specs=[_stream_spec(bt, obs_dim), _stream_spec(bt, A)]
                 + [_resident_spec(w) for w in weights],
        out_specs=_stream_spec(bt, 1),
        compiler_params=_COMPILER_PARAMS,
        cost_estimate=cost,
    )(obs, action, *weights)
    # RegressionHead squeezes the trailing size-1 dim -> (B,)
    return q[:, 0]


@functools.partial(jax.jit, static_argnames=("batch_tile",))
def _fused_impl(obs, params, batch_tile):
    B, obs_dim = obs.shape
    H = params["a_w1"].shape[1]
    A = params["a_w3"].shape[1]
    bt = _pick_bt(B, batch_tile)
    grid = (pl.cdiv(B, bt),)

    # Pack the two obs-consuming first layers into one lane-dense (obs_dim, 2H) weight.
    w1_packed = jnp.concatenate(
        [params["a_w1"], params["c_w1"][:obs_dim]], axis=1).astype(jnp.bfloat16)
    cw1a = params["c_w1"][obs_dim:].astype(jnp.bfloat16)

    weights = (w1_packed, params["a_b1"],
               params["a_w2"].astype(jnp.bfloat16), params["a_b2"],
               params["a_w3"].astype(jnp.bfloat16), params["a_b3"],
               cw1a, params["c_b1"],
               params["c_w2"].astype(jnp.bfloat16), params["c_b2"],
               params["c_w3"].astype(jnp.bfloat16), params["c_b3"])
    cost = pl.CostEstimate(
        flops=2 * B * (obs_dim * 2 * H + H * H + H * A + A * H + H * H + H),
        transcendentals=B * A,
        bytes_accessed=4 * B * (obs_dim + A + 1) + _weight_bytes(weights),
    )

    action, q = pl.pallas_call(
        _fused_kernel,
        out_shape=(jax.ShapeDtypeStruct((B, A), jnp.float32),
                   jax.ShapeDtypeStruct((B, 1), jnp.float32)),
        grid=grid,
        in_specs=[_stream_spec(bt, obs_dim)] + [_resident_spec(w) for w in weights],
        out_specs=[_stream_spec(bt, A), _stream_spec(bt, 1)],
        compiler_params=_COMPILER_PARAMS,
        cost_estimate=cost,
    )(obs, *weights)
    return action, q[:, 0]


# ------------------------------- public API --------------------------------- #

def compute_actor(obs, params, batch_tile=DEFAULT_BATCH_TILE):
    """obs: (B, obs_dim) f32 -> {'action': (B, action_dim)}"""
    return {"action": _actor_impl(obs, params, batch_tile=batch_tile)}


def compute_critic(inputs, params, batch_tile=DEFAULT_BATCH_TILE):
    """inputs: {'obs': (B, obs_dim), 'action': (B, action_dim)} -> {'q_value': (B,)}"""
    obs, action = inputs["obs"], inputs["action"]
    if action.ndim == 1:
        action = action[:, None]
    return {"q_value": _critic_impl(obs, action, params, batch_tile=batch_tile)}


def compute_actor_critic(obs, params, batch_tile=DEFAULT_BATCH_TILE):
    """Fused q(obs, pi(obs)): one kernel launch, action stays in VMEM."""
    action, q = _fused_impl(obs, params, batch_tile=batch_tile)
    return {"action": action, "q_value": q}


def qac_forward(inputs, mode, params):
    assert mode in ("compute_actor", "compute_critic")
    if mode == "compute_actor":
        return compute_actor(inputs, params)
    return compute_critic(inputs, params)


# ------------------------- deterministic param init ------------------------ #

def _linear_init(key, fan_in, fan_out):
    # PyTorch nn.Linear default: U(-1/sqrt(fan_in), 1/sqrt(fan_in)); stored as (in, out).
    kw, kb = jax.random.split(key)
    bound = 1.0 / jnp.sqrt(jnp.float32(fan_in))
    w = jax.random.uniform(kw, (fan_in, fan_out), jnp.float32, -bound, bound)
    b = jax.random.uniform(kb, (1, fan_out), jnp.float32, -bound, bound)
    return w, b


def init_qac_params(key, obs_dim, action_dim, hidden=64):
    keys = jax.random.split(key, 6)
    a_w1, a_b1 = _linear_init(keys[0], obs_dim, hidden)
    a_w2, a_b2 = _linear_init(keys[1], hidden, hidden)
    a_w3, a_b3 = _linear_init(keys[2], hidden, action_dim)
    c_w1, c_b1 = _linear_init(keys[3], obs_dim + action_dim, hidden)
    c_w2, c_b2 = _linear_init(keys[4], hidden, hidden)
    c_w3, c_b3 = _linear_init(keys[5], hidden, 1)
    return {
        "a_w1": a_w1, "a_b1": a_b1,
        "a_w2": a_w2, "a_b2": a_b2,
        "a_w3": a_w3, "a_b3": a_b3,
        "c_w1": c_w1, "c_b1": c_b1,   # full (obs_dim + action_dim, H) for the concat
        "c_w2": c_w2, "c_b2": c_b2,
        "c_w3": c_w3, "c_b3": c_b3,
    }


# ----------------------------- references (jnp) ------------------------------ #

def _dot_bf16(x, w):
    return jnp.dot(x.astype(jnp.bfloat16), w.astype(jnp.bfloat16),
                   preferred_element_type=jnp.float32)


def _dot_f32(x, w):
    return jnp.dot(x, w, preferred_element_type=jnp.float32)


def _ref_actor(obs, p, dot):
    h = jnp.maximum(dot(obs, p["a_w1"]) + p["a_b1"], 0.0)
    h = jnp.maximum(dot(h, p["a_w2"]) + p["a_b2"], 0.0)
    return jnp.tanh(dot(h, p["a_w3"]) + p["a_b3"])


def _ref_critic(obs, act, p, dot):
    x = jnp.concatenate([obs, act], axis=1)
    h = jnp.maximum(dot(x, p["c_w1"]) + p["c_b1"], 0.0)
    h = jnp.maximum(dot(h, p["c_w2"]) + p["c_b2"], 0.0)
    return (dot(h, p["c_w3"]) + p["c_b3"])[:, 0]


# ---------------------------------- main ------------------------------------ #

if __name__ == "__main__":
    B, OBS_DIM, ACT_DIM, HIDDEN = 4, 32, 8, 64

    key = jax.random.PRNGKey(0)
    k_param, k_obs, k_act, k_obs2, k_act2 = jax.random.split(key, 5)

    params = init_qac_params(k_param, OBS_DIM, ACT_DIM, HIDDEN)
    obs = jax.random.normal(k_obs, (B, OBS_DIM), jnp.float32)
    act = jax.random.normal(k_act, (B, ACT_DIM), jnp.float32)

    # --- module-mode forward (single ragged tile: 4 rows in an 8-row block) ---
    actor_out = qac_forward(obs, "compute_actor", params)
    critic_out = qac_forward({"obs": obs, "action": act}, "compute_critic", params)
    jax.block_until_ready(actor_out["action"])
    jax.block_until_ready(critic_out["q_value"])

    assert actor_out["action"].shape == (B, ACT_DIM)
    assert critic_out["q_value"].shape == (B,)

    # primary check: against a jnp reference using the same bf16-operand / f32-acc math
    ref_a_bf = _ref_actor(obs, params, _dot_bf16)
    ref_q_bf = _ref_critic(obs, act, params, _dot_bf16)
    assert jnp.allclose(actor_out["action"], ref_a_bf, atol=1e-3, rtol=1e-3)
    assert jnp.allclose(critic_out["q_value"], ref_q_bf, atol=1e-3, rtol=1e-3)
    # sanity check: close to the full-f32 PyTorch-equivalent reference
    assert jnp.allclose(actor_out["action"], _ref_actor(obs, params, _dot_f32),
                        atol=1e-1, rtol=1e-1)
    assert jnp.allclose(critic_out["q_value"], _ref_critic(obs, act, params, _dot_f32),
                        atol=1e-1, rtol=1e-1)

    # --- multi-step grid with a ragged last tile (no host-side padding) ---
    B2 = 300
    obs2 = jax.random.normal(k_obs2, (B2, OBS_DIM), jnp.float32)
    act2 = jax.random.normal(k_act2, (B2, ACT_DIM), jnp.float32)
    a2 = compute_actor(obs2, params, batch_tile=128)["action"]            # grid = 3
    q2 = compute_critic({"obs": obs2, "action": act2}, params, batch_tile=128)["q_value"]
    jax.block_until_ready(q2)
    assert a2.shape == (B2, ACT_DIM) and q2.shape == (B2,)
    assert jnp.allclose(a2, _ref_actor(obs2, params, _dot_bf16), atol=1e-3, rtol=1e-3)
    assert jnp.allclose(q2, _ref_critic(obs2, act2, params, _dot_bf16),
                        atol=1e-3, rtol=1e-3)

    # --- fused actor+critic: q(obs, pi(obs)) in one launch ---
    fused = compute_actor_critic(obs, params)
    jax.block_until_ready(fused["q_value"])
    assert jnp.allclose(fused["action"], ref_a_bf, atol=1e-3, rtol=1e-3)
    assert jnp.allclose(fused["q_value"], _ref_critic(obs, ref_a_bf, params, _dot_bf16),
                        atol=1e-3, rtol=1e-3)

    print("KERNEL_OK")
</pallas_src>

<mosaic_0001>
module attributes {stable_mosaic.version = 11 : i64} {
  func.func @_actor_kernel(%arg0: i32, %arg1: memref<8x32xf32, #tpu.memory_space<vmem>>, %arg2: memref<32x64xbf16, #tpu.memory_space<vmem>>, %arg3: memref<1x64xf32, #tpu.memory_space<vmem>>, %arg4: memref<64x64xbf16, #tpu.memory_space<vmem>>, %arg5: memref<1x64xf32, #tpu.memory_space<vmem>>, %arg6: memref<64x8xbf16, #tpu.memory_space<vmem>>, %arg7: memref<1x8xf32, #tpu.memory_space<vmem>>, %arg8: memref<8x8xf32, #tpu.memory_space<vmem>>) attributes {dimension_semantics = [#tpu.dimension_semantics<parallel>], iteration_bounds = array<i64: 1>, scalar_prefetch = 0 : i64, scratch_operands = 0 : i64, tpu.core_type = #tpu.core_type<tc>, window_params = [{transform_indices = @transform_0, window_bounds = array<i64: 8, 32>}, {pipeline_mode = #tpu.pipeline_mode<synchronous>, transform_indices = @transform_1, window_bounds = array<i64: 32, 64>}, {pipeline_mode = #tpu.pipeline_mode<synchronous>, transform_indices = @transform_2, window_bounds = array<i64: 1, 64>}, {pipeline_mode = #tpu.pipeline_mode<synchronous>, transform_indices = @transform_3, window_bounds = array<i64: 64, 64>}, {pipeline_mode = #tpu.pipeline_mode<synchronous>, transform_indices = @transform_4, window_bounds = array<i64: 1, 64>}, {pipeline_mode = #tpu.pipeline_mode<synchronous>, transform_indices = @transform_5, window_bounds = array<i64: 64, 8>}, {pipeline_mode = #tpu.pipeline_mode<synchronous>, transform_indices = @transform_6, window_bounds = array<i64: 1, 8>}, {transform_indices = @transform_7, window_bounds = array<i64: 8, 8>}]} {
    %c0 = arith.constant 0 : index
    %c0_0 = arith.constant 0 : index
    %0 = vector.load %arg1[%c0, %c0_0] : memref<8x32xf32, #tpu.memory_space<vmem>>, vector<8x32xf32>
    %1 = arith.truncf %0 : vector<8x32xf32> to vector<8x32xbf16>
    %c0_1 = arith.constant 0 : index
    %c0_2 = arith.constant 0 : index
    %2 = vector.load %arg2[%c0_1, %c0_2] : memref<32x64xbf16, #tpu.memory_space<vmem>>, vector<32x64xbf16>
    %cst = arith.constant dense<0.000000e+00> : vector<8x64xf32>
    %3 = tpu.matmul %1, %2, %cst {dimension_numbers = #tpu.dot_dimension_numbers<[1], [0], [0], [1], [0, 0, 1, 1], [], []>} : vector<8x32xbf16>, vector<32x64xbf16>, vector<8x64xf32> -> vector<8x64xf32>
    %c0_3 = arith.constant 0 : index
    %c0_4 = arith.constant 0 : index
    %4 = vector.load %arg3[%c0_3, %c0_4] : memref<1x64xf32, #tpu.memory_space<vmem>>, vector<1x64xf32>
    %5 = vector.broadcast %4 : vector<1x64xf32> to vector<8x64xf32>
    %6 = arith.addf %3, %5 : vector<8x64xf32>
    %cst_5 = arith.constant 0.000000e+00 : f32
    %7 = vector.broadcast %cst_5 : f32 to vector<8x64xf32>
    %8 = arith.maximumf %6, %7 : vector<8x64xf32>
    %9 = arith.truncf %8 : vector<8x64xf32> to vector<8x64xbf16>
    %c0_6 = arith.constant 0 : index
    %c0_7 = arith.constant 0 : index
    %10 = vector.load %arg4[%c0_6, %c0_7] : memref<64x64xbf16, #tpu.memory_space<vmem>>, vector<64x64xbf16>
    %cst_8 = arith.constant dense<0.000000e+00> : vector<8x64xf32>
    %11 = tpu.matmul %9, %10, %cst_8 {dimension_numbers = #tpu.dot_dimension_numbers<[1], [0], [0], [1], [0, 0, 1, 1], [], []>} : vector<8x64xbf16>, vector<64x64xbf16>, vector<8x64xf32> -> vector<8x64xf32>
    %c0_9 = arith.constant 0 : index
    %c0_10 = arith.constant 0 : index
    %12 = vector.load %arg5[%c0_9, %c0_10] : memref<1x64xf32, #tpu.memory_space<vmem>>, vector<1x64xf32>
    %13 = vector.broadcast %12 : vector<1x64xf32> to vector<8x64xf32>
    %14 = arith.addf %11, %13 : vector<8x64xf32>
    %cst_11 = arith.constant 0.000000e+00 : f32
    %15 = vector.broadcast %cst_11 : f32 to vector<8x64xf32>
    %16 = arith.maximumf %14, %15 : vector<8x64xf32>
    %17 = arith.truncf %16 : vector<8x64xf32> to vector<8x64xbf16>
    %c0_12 = arith.constant 0 : index
    %c0_13 = arith.constant 0 : index
    %18 = vector.load %arg6[%c0_12, %c0_13] : memref<64x8xbf16, #tpu.memory_space<vmem>>, vector<64x8xbf16>
    %cst_14 = arith.constant dense<0.000000e+00> : vector<8x8xf32>
    %19 = tpu.matmul %17, %18, %cst_14 {dimension_numbers = #tpu.dot_dimension_numbers<[1], [0], [0], [1], [0, 0, 1, 1], [], []>} : vector<8x64xbf16>, vector<64x8xbf16>, vector<8x8xf32> -> vector<8x8xf32>
    %c0_15 = arith.constant 0 : index
    %c0_16 = arith.constant 0 : index
    %20 = vector.load %arg7[%c0_15, %c0_16] : memref<1x8xf32, #tpu.memory_space<vmem>>, vector<1x8xf32>
    %21 = vector.broadcast %20 : vector<1x8xf32> to vector<8x8xf32>
    %22 = arith.addf %19, %21 : vector<8x8xf32>
    %23 = math.tanh %22 : vector<8x8xf32>
    %c0_17 = arith.constant 0 : index
    %c0_18 = arith.constant 0 : index
    %24 = vector.load %arg8[%c0_17, %c0_18] : memref<8x8xf32, #tpu.memory_space<vmem>>, vector<8x8xf32>
    tpu.vector_store %arg8[%c0_17, %c0_18], %23 {strides = array<i32>} : memref<8x8xf32, #tpu.memory_space<vmem>>, vector<8x8xf32>,
    return
  }
  func.func @transform_0(%arg0: i32) -> (i32, i32) {
    %c0_i32 = arith.constant 0 : i32
    %c0_i32_0 = arith.constant 0 : i32
    return %arg0, %c0_i32 : i32, i32
  }
  func.func @transform_1(%arg0: i32) -> (i32, i32) {
    %c0_i32 = arith.constant 0 : i32
    %c0_i32_0 = arith.constant 0 : i32
    %c0_i32_1 = arith.constant 0 : i32
    return %c0_i32, %c0_i32_0 : i32, i32
  }
  func.func @transform_2(%arg0: i32) -> (i32, i32) {
    %c0_i32 = arith.constant 0 : i32
    %c0_i32_0 = arith.constant 0 : i32
    %c0_i32_1 = arith.constant 0 : i32
    return %c0_i32, %c0_i32_0 : i32, i32
  }
  func.func @transform_3(%arg0: i32) -> (i32, i32) {
    %c0_i32 = arith.constant 0 : i32
    %c0_i32_0 = arith.constant 0 : i32
    %c0_i32_1 = arith.constant 0 : i32
    return %c0_i32, %c0_i32_0 : i32, i32
  }
  func.func @transform_4(%arg0: i32) -> (i32, i32) {
    %c0_i32 = arith.constant 0 : i32
    %c0_i32_0 = arith.constant 0 : i32
    %c0_i32_1 = arith.constant 0 : i32
    return %c0_i32, %c0_i32_0 : i32, i32
  }
  func.func @transform_5(%arg0: i32) -> (i32, i32) {
    %c0_i32 = arith.constant 0 : i32
    %c0_i32_0 = arith.constant 0 : i32
    %c0_i32_1 = arith.constant 0 : i32
    return %c0_i32, %c0_i32_0 : i32, i32
  }
  func.func @transform_6(%arg0: i32) -> (i32, i32) {
    %c0_i32 = arith.constant 0 : i32
    %c0_i32_0 = arith.constant 0 : i32
    %c0_i32_1 = arith.constant 0 : i32
    return %c0_i32, %c0_i32_0 : i32, i32
  }
  func.func @transform_7(%arg0: i32) -> (i32, i32) {
    %c0_i32 = arith.constant 0 : i32
    %c0_i32_0 = arith.constant 0 : i32
    return %arg0, %c0_i32 : i32, i32
  }
}

</mosaic_0001>

<llo_original>
// kernel: _actor_impl.1
$region0: #{_actor_impl.1}
  #allocation0 [shape = 'u32[]', space=smem, size = 0x4, offset = 0x4, fixed_abs, tag = 'smem constant byte address 0x4 - core index']
  #allocation1 [shape = 'u32[144,128]{1,0:T(1,128)}', space=vmem, size = 0x12000, scoped, tag = 'internal scratch']
  %s0 = inlined_call_operand.vmem [shape: f32[4,32], index: 0, kind: input, shape index: {}]
  %s1 = inlined_call_operand.vmem [shape: bf16[32,64], index: 1, kind: input, shape index: {}]
  %s2 = inlined_call_operand.vmem [shape: f32[1,64], index: 2, kind: input, shape index: {}]
  %s3 = inlined_call_operand.vmem [shape: bf16[64,64], index: 3, kind: input, shape index: {}]
  %s4 = inlined_call_operand.vmem [shape: f32[1,64], index: 4, kind: input, shape index: {}]
  %s5 = inlined_call_operand.vmem [shape: bf16[64,8], index: 5, kind: input, shape index: {}]
  %s6 = inlined_call_operand.vmem [shape: f32[1,8], index: 6, kind: input, shape index: {}]
  %s7 = inlined_call_operand.hbm [shape: f32[4,8], index: 7, kind: output, shape index: {}]
  %s8 = sld [smem:[#allocation0]]
  $region38: #{_actor_impl.1} parent=0
    _
  %s10 = ssub.s32 1, %s8
  %s11 = scalar_select 0, %s10, %s8
  $region1: #{_actor_impl.1} parent=0
    #allocation2 [shape = 'u8[4096]{0}', space=vmem, size = 0x1000, scoped, tag = 'output window, operand 0, single buffered']
    #allocation3 [shape = 's32[1]{0}', space=sflag, size = 0x4, scoped, tag = 'scoped memory for _actor_impl.1']
    %12 = vsyncpa [#allocation3], 0
    // Predicated region
    $region2: #{_actor_impl.1} parent=1 // pred_check
      _
    $region3: #{_actor_impl.1} parent=1 // pred_check_branch
      %14 = sbr.rel (0) target = $region5
    $region4: #{_actor_impl.1} parent=1 // pred_region
      _
    $region5: #{_actor_impl.1} parent=1 // pred_fallthru
      _
    // Predicated region
    $region6: #{_actor_impl.1} parent=1 // pred_check
      _
    $region7: #{_actor_impl.1} parent=1 // pred_check_branch
      %16 = sbr.rel (0) target = $region9
    $region8: #{_actor_impl.1} parent=1 // pred_region
      _
    $region9: #{_actor_impl.1} parent=1 // pred_fallthru
      _
    // Predicated region
    $region10: #{_actor_impl.1} parent=1 // pred_check
      _
    $region11: #{_actor_impl.1} parent=1 // pred_check_branch
      %18 = sbr.rel (0) target = $region13
    $region12: #{_actor_impl.1} parent=1 // pred_region
      _
    $region13: #{_actor_impl.1} parent=1 // pred_fallthru
      _
    // Predicated region
    $region14: #{_actor_impl.1} parent=1 // pred_check
      _
    $region15: #{_actor_impl.1} parent=1 // pred_check_branch
      %20 = sbr.rel (0) target = $region17
    $region16: #{_actor_impl.1} parent=1 // pred_region
      _
    $region17: #{_actor_impl.1} parent=1 // pred_fallthru
      _
    // Predicated region
    $region18: #{_actor_impl.1} parent=1 // pred_check
      _
    $region19: #{_actor_impl.1} parent=1 // pred_check_branch
      %22 = sbr.rel (0) target = $region21
    $region20: #{_actor_impl.1} parent=1 // pred_region
      _
    $region21: #{_actor_impl.1} parent=1 // pred_fallthru
      _
    // Predicated region
    $region22: #{_actor_impl.1} parent=1 // pred_check
      _
    $region23: #{_actor_impl.1} parent=1 // pred_check_branch
      %24 = sbr.rel (0) target = $region25
    $region24: #{_actor_impl.1} parent=1 // pred_region
      _
    $region25: #{_actor_impl.1} parent=1 // pred_fallthru
      _
    // Predicated region
    $region26: #{_actor_impl.1} parent=1 // pred_check
      _
    $region27: #{_actor_impl.1} parent=1 // pred_check_branch
      %26 = sbr.rel (0) target = $region29
    $region28: #{_actor_impl.1} parent=1 // pred_region
      _
    $region29: #{_actor_impl.1} parent=1 // pred_fallthru
      _
    %v28 = vld [vmem:[%s0] sm:$0xff]
    %v29 = vpack.c.bf16 %v28, %v28
    %v30 = vld [vmem:[%s1] sm:$0xf]
    %v31 = vld [vmem:[%s1 + $0x4] sm:$0xf]
    %v32 = vld [vmem:[%s1 + $0x8] sm:$0xf]
    %v33 = vld [vmem:[%s1 + $0xc] sm:$0xf]
    %v34 = vld [vmem:[%s2] sm:$0x1]
    %v36 = vlaneseq
    %v37 = vshrl.u32 %v36, 7
    %v38 = vsub.s32 0, %v37
    %v39 = vrot.slane %v34, %v38
    %v45 = vunpack.c.l.b16 %v30
    %v46 = vunpack.c.l.b16 %v31
    %v47 = vunpack.c.l.b16 %v32
    %v48 = vunpack.c.l.b16 %v33
    %v49 = vpack.c.b16 %v46, %v45
    %v50 = vpack.c.b16 %v48, %v47
    %vm53 = vcmask 261120
    %v55 = vsel %vm53, %v29, 0
    %57 = vmatprep.subr.bf16.mxu0 0
    %58 = vmatpush1.bf16.msra.mxu0 %v49
    %59 = vmatprep.subr.bf16.mxu0 0
    %60 = vmatpush1.bf16.msra.mxu0 %v50
    %61 = vmatprep.subr.bf16.mxu0 0
    %62 = vmatpush1.bf16.msra.mxu0 0
    %63 = vmatprep.subr.bf16.mxu0 0
    %64 = vmatpush1.bf16.msra.mxu0 0
    %65 = vmatprep.subr.bf16.mxu0 0
    %66 = vmatpush1.bf16.msra.mxu0 0
    %67 = vmatprep.subr.bf16.mxu0 0
    %68 = vmatpush1.bf16.msra.mxu0 0
    %69 = vmatprep.subr.bf16.mxu0 0
    %70 = vmatpush1.bf16.msra.mxu0 0
    %71 = vmatprep.subr.bf16.mxu0 0
    %72 = vmatpush1.bf16.msra.mxu0 0
    %73 = vmatprep.subr.bf16.mxu0 0
    %74 = vmatpush1.bf16.msra.mxu0 0
    %75 = vmatprep.subr.bf16.mxu0 0
    %76 = vmatpush1.bf16.msra.mxu0 0
    %77 = vmatprep.subr.bf16.mxu0 0
    %78 = vmatpush1.bf16.msra.mxu0 0
    %79 = vmatprep.subr.bf16.mxu0 0
    %80 = vmatpush1.bf16.msra.mxu0 0
    %81 = vmatprep.subr.bf16.mxu0 0
    %82 = vmatpush1.bf16.msra.mxu0 0
    %83 = vmatprep.subr.bf16.mxu0 0
    %84 = vmatpush1.bf16.msra.mxu0 0
    %85 = vmatprep.subr.bf16.mxu0 0
    %86 = vmatpush1.bf16.msra.mxu0 0
    %87 = vmatprep.subr.bf16.mxu0 0
    %88 = vmatpush1.bf16.msra.mxu0 0
    %89 = vmatprep.mubr.bf16.mxu0 0
    %90 = vmatmul.mubr.bf16.gmra.mrb[0].mxu0 %v55
    %v91 = vpop.f32.mrb[0].mxu0
    %v92 = vadd.f32 %v39, %v91
    %v93 = vpop.f32.mrb[0].mxu0
    %v94 = vpop.f32.mrb[0].mxu0
    %v95 = vpop.f32.mrb[0].mxu0
    %96 = vdwg.mxu0
    %v97 = vmax.f32 %v92, 0.0
    %v98 = vpack.c.bf16 %v97, %v97
    %v99 = vld [vmem:[%s3] sm:$0xf]
    %v100 = vld [vmem:[%s3 + $0x4] sm:$0xf]
    %v101 = vld [vmem:[%s3 + $0x8] sm:$0xf]
    %v102 = vld [vmem:[%s3 + $0xc] sm:$0xf]
    %v103 = vld [vmem:[%s3 + $0x10] sm:$0xf]
    %v104 = vld [vmem:[%s3 + $0x14] sm:$0xf]
    %v105 = vld [vmem:[%s3 + $0x18] sm:$0xf]
    %v106 = vld [vmem:[%s3 + $0x1c] sm:$0xf]
    %v107 = vld [vmem:[%s4] sm:$0x1]
    %v109 = vlaneseq
    %v110 = vshrl.u32 %v109, 7
    %v111 = vsub.s32 0, %v110
    %v112 = vrot.slane %v107, %v111
    %v122 = vunpack.c.l.b16 %v99
    %v123 = vunpack.c.l.b16 %v100
    %v124 = vunpack.c.l.b16 %v101
    %v125 = vunpack.c.l.b16 %v102
    %v126 = vunpack.c.l.b16 %v103
    %v127 = vunpack.c.l.b16 %v104
    %v128 = vunpack.c.l.b16 %v105
    %v129 = vunpack.c.l.b16 %v106
    %v130 = vpack.c.b16 %v123, %v122
    %v131 = vpack.c.b16 %v125, %v124
    %v132 = vpack.c.b16 %v127, %v126
    %v133 = vpack.c.b16 %v129, %v128
    %vm138 = vcmask 523264
    %v140 = vsel %vm138, %v98, 0
    %142 = vmatprep.subr.bf16.mxu0 0
    %143 = vmatpush1.bf16.msra.mxu0 %v130
    %144 = vmatprep.subr.bf16.mxu0 0
    %145 = vmatpush1.bf16.msra.mxu0 %v131
    %146 = vmatprep.subr.bf16.mxu0 0
    %147 = vmatpush1.bf16.msra.mxu0 %v132
    %148 = vmatprep.subr.bf16.mxu0 0
    %149 = vmatpush1.bf16.msra.mxu0 %v133
    %150 = vmatprep.subr.bf16.mxu0 0
    %151 = vmatpush1.bf16.msra.mxu0 0
    %152 = vmatprep.subr.bf16.mxu0 0
    %153 = vmatpush1.bf16.msra.mxu0 0
    %154 = vmatprep.subr.bf16.mxu0 0
    %155 = vmatpush1.bf16.msra.mxu0 0
    %156 = vmatprep.subr.bf16.mxu0 0
    %157 = vmatpush1.bf16.msra.mxu0 0
    %158 = vmatprep.subr.bf16.mxu0 0
    %159 = vmatpush1.bf16.msra.mxu0 0
    %160 = vmatprep.subr.bf16.mxu0 0
    %161 = vmatpush1.bf16.msra.mxu0 0
    %162 = vmatprep.subr.bf16.mxu0 0
    %163 = vmatpush1.bf16.msra.mxu0 0
    %164 = vmatprep.subr.bf16.mxu0 0
    %165 = vmatpush1.bf16.msra.mxu0 0
    %166 = vmatprep.subr.bf16.mxu0 0
    %167 = vmatpush1.bf16.msra.mxu0 0
    %168 = vmatprep.subr.bf16.mxu0 0
    %169 = vmatpush1.bf16.msra.mxu0 0
    %170 = vmatprep.subr.bf16.mxu0 0
    %171 = vmatpush1.bf16.msra.mxu0 0
    %172 = vmatprep.subr.bf16.mxu0 0
    %173 = vmatpush1.bf16.msra.mxu0 0
    %174 = vmatprep.mubr.bf16.mxu0 0
    %175 = vmatmul.mubr.bf16.gmra.mrb[0].mxu0 %v140
    %v176 = vpop.f32.mrb[0].mxu0
    %v177 = vadd.f32 %v112, %v176
    %v178 = vpop.f32.mrb[0].mxu0
    %v179 = vpop.f32.mrb[0].mxu0
    %v180 = vpop.f32.mrb[0].mxu0
    %181 = vdwg.mxu0
    %v182 = vmax.f32 %v177, 0.0
    %v183 = vpack.c.bf16 %v182, %v182
    %v184 = vld [vmem:[%s5] sm:$0xf]
    %v185 = vld [vmem:[%s5 + $0x4] sm:$0xf]
    %v186 = vld [vmem:[%s5 + $0x8] sm:$0xf]
    %v187 = vld [vmem:[%s5 + $0xc] sm:$0xf]
    %v188 = vld [vmem:[%s5 + $0x10] sm:$0xf]
    %v189 = vld [vmem:[%s5 + $0x14] sm:$0xf]
    %v190 = vld [vmem:[%s5 + $0x18] sm:$0xf]
    %v191 = vld [vmem:[%s5 + $0x1c] sm:$0xf]
    %v192 = vld [vmem:[%s6] sm:$0x1]
    %v194 = vlaneseq
    %v195 = vshrl.u32 %v194, 7
    %v196 = vsub.s32 0, %v195
    %v197 = vrot.slane %v192, %v196
    %v207 = vunpack.c.l.b16 %v184
    %v208 = vunpack.c.l.b16 %v185
    %v209 = vunpack.c.l.b16 %v186
    %v210 = vunpack.c.l.b16 %v187
    %v211 = vunpack.c.l.b16 %v188
    %v212 = vunpack.c.l.b16 %v189
    %v213 = vunpack.c.l.b16 %v190
    %v214 = vunpack.c.l.b16 %v191
    %v215 = vpack.c.b16 %v208, %v207
    %v216 = vpack.c.b16 %v210, %v209
    %v217 = vpack.c.b16 %v212, %v211
    %v218 = vpack.c.b16 %v214, %v213
    %v224 = vsel %vm138, %v183, 0
    %226 = vmatprep.subr.bf16.mxu0 0
    %227 = vmatpush1.bf16.msra.mxu0 %v215
    %228 = vmatprep.subr.bf16.mxu0 0
    %229 = vmatpush1.bf16.msra.mxu0 %v216
    %230 = vmatprep.subr.bf16.mxu0 0
    %231 = vmatpush1.bf16.msra.mxu0 %v217
    %232 = vmatprep.subr.bf16.mxu0 0
    %233 = vmatpush1.bf16.msra.mxu0 %v218
    %234 = vmatprep.subr.bf16.mxu0 0
    %235 = vmatpush1.bf16.msra.mxu0 0
    %236 = vmatprep.subr.bf16.mxu0 0
    %237 = vmatpush1.bf16.msra.mxu0 0
    %238 = vmatprep.subr.bf16.mxu0 0
    %239 = vmatpush1.bf16.msra.mxu0 0
    %240 = vmatprep.subr.bf16.mxu0 0
    %241 = vmatpush1.bf16.msra.mxu0 0
    %242 = vmatprep.subr.bf16.mxu0 0
    %243 = vmatpush1.bf16.msra.mxu0 0
    %244 = vmatprep.subr.bf16.mxu0 0
    %245 = vmatpush1.bf16.msra.mxu0 0
    %246 = vmatprep.subr.bf16.mxu0 0
    %247 = vmatpush1.bf16.msra.mxu0 0
    %248 = vmatprep.subr.bf16.mxu0 0
    %249 = vmatpush1.bf16.msra.mxu0 0
    %250 = vmatprep.subr.bf16.mxu0 0
    %251 = vmatpush1.bf16.msra.mxu0 0
    %252 = vmatprep.subr.bf16.mxu0 0
    %253 = vmatpush1.bf16.msra.mxu0 0
    %254 = vmatprep.subr.bf16.mxu0 0
    %255 = vmatpush1.bf16.msra.mxu0 0
    %256 = vmatprep.subr.bf16.mxu0 0
    %257 = vmatpush1.bf16.msra.mxu0 0
    %258 = vmatprep.mubr.bf16.mxu0 0
    %259 = vmatmul.mubr.bf16.gmra.mrb[0].mxu0 %v224
    %v260 = vpop.f32.mrb[0].mxu0
    %v261 = vadd.f32 %v197, %v260
    %v262 = vpop.f32.mrb[0].mxu0
    %v263 = vpop.f32.mrb[0].mxu0
    %v264 = vpop.f32.mrb[0].mxu0
    %265 = vdwg.mxu0
    %v266 = vtanh.pop %v261
    %vm267 = vcmask 64512
    %268 = vst.msk [vmem:[#allocation2] sm:$0xff] %vm267, %v266
    // Predicated region
    $region30: #{_actor_impl.1} parent=1 // pred_check
      _
    $region31: #{_actor_impl.1} parent=1 // pred_check_branch
      %270 = sbr.rel (0) target = $region33
    $region32: #{_actor_impl.1} parent=1 // pred_region
      %s272 = ssub.s32 128, 64
      %273 = vsyncadd [#allocation3], %s272
      %s274 = sshll.u32 [#allocation2], 4
      %s275 = int_to_ptr.vmem [resolvable:$true] %s274
      %280 = dma.vmem_to_hbm [thread:$0]  %s275, 64, %s7, [#allocation3], 64, 64, 4
    $region33: #{_actor_impl.1} parent=1 // pred_fallthru
      _
    // Predicated region
    $region34: #{_actor_impl.1} parent=1 // pred_check
      _
    $region35: #{_actor_impl.1} parent=1 // pred_check_branch
      %282 = sbr.rel (0) target = $region37
    $region36: #{_actor_impl.1} parent=1 // pred_region
      %283 = dma.done [#allocation3], 128
    $region37: #{_actor_impl.1} parent=1 // pred_fallthru
      _
    %284 = vsyncpa [#allocation3], 1

</llo_original>
